<compile_context>
chip_gen: v6e
topology: v6e:2x2x1
jax: 0.10.0
libtpu: 0.0.40
codegen_flags: <defaults>
</compile_context>

<pallas_src>
import jax
import jax.numpy as jnp
import numpy as np
from jax.experimental import pallas as pl
from jax.experimental.pallas import tpu as pltpu


def _leaky_relu(x, slope=0.01):
    # torch.nn.LeakyReLU default negative_slope = 0.01
    return jnp.where(x > 0, x, slope * x)


def mil_attention_kernel(x_ref, w1_ref, b1_ref, w2_ref, b2_ref,
                         wc1_ref, bc1_ref, wc2_ref, bc2_ref, out_ref):
    x3 = x_ref[...]                               # (TB, N, D): TB bags of this tile
    tb, n, d = x3.shape
    xf = x3.reshape(tb * n, d)                    # leading-dim merge (layout preserving, N=8)

    # ---- attention projection, shared weights -> one flat MXU matmul ----
    h = jnp.dot(xf, w1_ref[...], preferred_element_type=jnp.float32) + b1_ref[...]
    h = _leaky_relu(h)                            # (TB*N, D)
    h3 = h.reshape(tb, n, d)

    # ---- instance scores with N on the lane axis: s[b,n] = h3[b,n,:] . w2 + b2 ----
    s = jnp.sum(h3 * w2_ref[...], axis=-1) + b2_ref[0, 0]          # (TB, N)

    # ---- softmax over instances (lane reductions; EUP approx reciprocal) ----
    mx = jnp.max(s, axis=-1, keepdims=True)
    e = jnp.exp(s - mx)
    w = e * pl.reciprocal(jnp.sum(e, axis=-1, keepdims=True), approx=True)   # (TB, N)

    # ---- attention-weighted pooling as ONE MXU matmul ----
    # Block-diagonal (TB, TB*N) matrix: row b holds w[b, :] in cols [b*N, (b+1)*N).
    w_rep = jnp.concatenate([w] * tb, axis=1)                      # (TB, TB*N)
    col = jax.lax.broadcasted_iota(jnp.int32, (tb, tb * n), 1)
    lo = jax.lax.broadcasted_iota(jnp.int32, (tb, tb * n), 0) * n
    w_blk = jnp.where((col >= lo) & (col < lo + n), w_rep, 0.0)
    agg = jnp.dot(w_blk, xf, preferred_element_type=jnp.float32)   # (TB, D)

    # ---- classifier: Linear(D,M) -> LeakyReLU -> Linear(M,1) -> Sigmoid -> clamp ----
    hc = jnp.dot(agg, wc1_ref[...], preferred_element_type=jnp.float32) + bc1_ref[...]
    hc = _leaky_relu(hc)
    y = jnp.dot(hc, wc2_ref[...], preferred_element_type=jnp.float32) + bc2_ref[0, 0]
    y = pl.reciprocal(1.0 + jnp.exp(-y), approx=True)              # sigmoid  (TB, 1)
    y = jnp.clip(y, 1e-5, 1.0 - 1e-5)

    # ---- lane-dense store: move the bag index from sublanes to lanes ----
    bag_i = jax.lax.broadcasted_iota(jnp.int32, (tb, tb), 0)
    lane_i = jax.lax.broadcasted_iota(jnp.int32, (tb, tb), 1)
    y_row = jnp.sum(jnp.where(bag_i == lane_i, y, 0.0), axis=0, keepdims=True)  # (1, TB)
    out_ref[...] = y_row.reshape(1, 1, tb)


def mil_softmax_attention(bag_feature, batch_size, params, tile_b=None):
    """bag_feature: (B*N, D) float32 row-major. Returns (B,) float32 predictions."""
    d = params["w1"].shape[0]
    m = params["wc1"].shape[1]
    x = bag_feature.reshape(batch_size, -1, d)
    b, n, _ = x.shape

    if tile_b is None:
        tile_b = min(b, 128)            # TILE_B*N rows per MXU pass; tiny vs VMEM budget
    num_tiles = pl.cdiv(b, tile_b)
    bp = num_tiles * tile_b
    if bp != b:
        x = jnp.pad(x, ((0, bp - b), (0, 0), (0, 0)))   # zero bags, sliced off below

    w2_row = params["w2"].reshape(1, d)                 # score weights, row layout

    out = pl.pallas_call(
        mil_attention_kernel,
        out_shape=jax.ShapeDtypeStruct((num_tiles, 1, tile_b), jnp.float32),
        grid=(num_tiles,),
        in_specs=[
            pl.BlockSpec((tile_b, n, d), lambda t: (t, 0, 0)),        # per-tile instances
            pl.BlockSpec((d, d), lambda t: (0, 0)),                   # proj[0].weight
            pl.BlockSpec((1, d), lambda t: (0, 0)),                   # proj[0].bias
            pl.BlockSpec((1, d), lambda t: (0, 0)),                   # proj[2].weight (row)
            pl.BlockSpec(memory_space=pltpu.MemorySpace.SMEM),        # proj[2].bias (scalar)
            pl.BlockSpec((d, m), lambda t: (0, 0)),                   # classifier[0].weight
            pl.BlockSpec((1, m), lambda t: (0, 0)),                   # classifier[0].bias
            pl.BlockSpec((m, 1), lambda t: (0, 0)),                   # classifier[2].weight
            pl.BlockSpec(memory_space=pltpu.MemorySpace.SMEM),        # classifier[2].bias
        ],
        out_specs=pl.BlockSpec((1, 1, tile_b), lambda t: (t, 0, 0)),  # per-step, lane-dense
        compiler_params=pltpu.CompilerParams(dimension_semantics=("parallel",)),
    )(x, params["w1"], params["b1"], w2_row, params["b2"],
      params["wc1"], params["bc1"], params["wc2"], params["bc2"])
    return out.reshape(bp)[:batch_size]


def reference(bag_feature, batch_size, p):
    """Pure-JAX replica of the PyTorch forward for verification."""
    d = p["w1"].shape[0]
    h = _leaky_relu(bag_feature @ p["w1"] + p["b1"])
    s = (h @ p["w2"] + p["b2"]).reshape(batch_size, -1, 1)
    w = jax.nn.softmax(s, axis=1)
    x = bag_feature.reshape(batch_size, -1, d)
    agg = jnp.sum(w * x, axis=1)
    hc = _leaky_relu(agg @ p["wc1"] + p["bc1"])
    y = jax.nn.sigmoid(hc @ p["wc2"] + p["bc2"])
    y = jnp.clip(y, 1e-5, 1.0 - 1e-5)
    return y.reshape(batch_size)


if __name__ == "__main__":
    # Small shapes consistent with the module: inplanes=32, midplanes=16,
    # batch_size=2, 8 instances per bag -> bag_feature is (16, 32).
    B, N, D, M = 2, 8, 32, 16

    key = jax.random.PRNGKey(0)
    ks = jax.random.split(key, 10)
    scale = 0.1
    params = {
        "w1":  scale * jax.random.normal(ks[0], (D, D), jnp.float32),
        "b1":  scale * jax.random.normal(ks[1], (1, D), jnp.float32),
        "w2":  scale * jax.random.normal(ks[2], (D, 1), jnp.float32),
        "b2":  scale * jax.random.normal(ks[3], (1, 1), jnp.float32),
        "wc1": scale * jax.random.normal(ks[4], (D, M), jnp.float32),
        "bc1": scale * jax.random.normal(ks[5], (1, M), jnp.float32),
        "wc2": scale * jax.random.normal(ks[6], (M, 1), jnp.float32),
        "bc2": scale * jax.random.normal(ks[7], (1, 1), jnp.float32),
    }
    bag_feature = jax.random.normal(ks[8], (B * N, D), jnp.float32)

    y_kernel = jax.block_until_ready(mil_softmax_attention(bag_feature, B, params))
    y_ref = jax.block_until_ready(reference(bag_feature, B, params))

    assert y_kernel.shape == (B,)
    # Tolerance is slightly loose because the kernel uses the EUP approximate
    # reciprocal (softmax denominator + sigmoid); real mistakes (wrong axis,
    # wrong weights) would be orders of magnitude larger.
    if not np.allclose(np.asarray(y_kernel), np.asarray(y_ref), rtol=5e-3, atol=5e-3):
        raise AssertionError(f"mismatch: kernel={y_kernel} ref={y_ref}")
    print("KERNEL_OK")
</pallas_src>

<mosaic_0001>
module attributes {stable_mosaic.version = 11 : i64} {
  func.func @mil_attention_kernel(%arg0: i32, %arg1: memref<2x8x32xf32, #tpu.memory_space<vmem>>, %arg2: memref<32x32xf32, #tpu.memory_space<vmem>>, %arg3: memref<1x32xf32, #tpu.memory_space<vmem>>, %arg4: memref<1x32xf32, #tpu.memory_space<vmem>>, %arg5: memref<1x1xf32, #tpu.memory_space<smem>>, %arg6: memref<32x16xf32, #tpu.memory_space<vmem>>, %arg7: memref<1x16xf32, #tpu.memory_space<vmem>>, %arg8: memref<16x1xf32, #tpu.memory_space<vmem>>, %arg9: memref<1x1xf32, #tpu.memory_space<smem>>, %arg10: memref<1x1x2xf32, #tpu.memory_space<vmem>>) attributes {dimension_semantics = [#tpu.dimension_semantics<parallel>], iteration_bounds = array<i64: 1>, scalar_prefetch = 0 : i64, scratch_operands = 0 : i64, tpu.core_type = #tpu.core_type<tc>, window_params = [{transform_indices = @transform_0, window_bounds = array<i64: 2, 8, 32>}, {pipeline_mode = #tpu.pipeline_mode<synchronous>, transform_indices = @transform_1, window_bounds = array<i64: 32, 32>}, {pipeline_mode = #tpu.pipeline_mode<synchronous>, transform_indices = @transform_2, window_bounds = array<i64: 1, 32>}, {pipeline_mode = #tpu.pipeline_mode<synchronous>, transform_indices = @transform_3, window_bounds = array<i64: 1, 32>}, {transform_indices = @transform_4, window_bounds = array<i64: 1, 1>}, {pipeline_mode = #tpu.pipeline_mode<synchronous>, transform_indices = @transform_5, window_bounds = array<i64: 32, 16>}, {pipeline_mode = #tpu.pipeline_mode<synchronous>, transform_indices = @transform_6, window_bounds = array<i64: 1, 16>}, {pipeline_mode = #tpu.pipeline_mode<synchronous>, transform_indices = @transform_7, window_bounds = array<i64: 16, 1>}, {transform_indices = @transform_8, window_bounds = array<i64: 1, 1>}, {transform_indices = @transform_9, window_bounds = array<i64: 1, 1, 2>}]} {
    %c0 = arith.constant 0 : index
    %c0_0 = arith.constant 0 : index
    %c0_1 = arith.constant 0 : index
    %0 = vector.load %arg1[%c0, %c0_0, %c0_1] : memref<2x8x32xf32, #tpu.memory_space<vmem>>, vector<2x8x32xf32>
    %1 = vector.shape_cast %0 : vector<2x8x32xf32> to vector<16x32xf32>
    %c0_2 = arith.constant 0 : index
    %c0_3 = arith.constant 0 : index
    %2 = vector.load %arg2[%c0_2, %c0_3] : memref<32x32xf32, #tpu.memory_space<vmem>>, vector<32x32xf32>
    %cst = arith.constant dense<0.000000e+00> : vector<16x32xf32>
    %3 = tpu.matmul %1, %2, %cst {dimension_numbers = #tpu.dot_dimension_numbers<[1], [0], [0], [1], [0, 0, 1, 1], [], []>} : vector<16x32xf32>, vector<32x32xf32>, vector<16x32xf32> -> vector<16x32xf32>
    %c0_4 = arith.constant 0 : index
    %c0_5 = arith.constant 0 : index
    %4 = vector.load %arg3[%c0_4, %c0_5] : memref<1x32xf32, #tpu.memory_space<vmem>>, vector<1x32xf32>
    %5 = vector.broadcast %4 : vector<1x32xf32> to vector<16x32xf32>
    %6 = arith.addf %3, %5 : vector<16x32xf32>
    %cst_6 = arith.constant 0.000000e+00 : f32
    %7 = vector.broadcast %cst_6 : f32 to vector<16x32xf32>
    %8 = arith.cmpf ogt, %6, %7 : vector<16x32xf32>
    %cst_7 = arith.constant 0.00999999977 : f32
    %9 = vector.broadcast %cst_7 : f32 to vector<16x32xf32>
    %10 = arith.mulf %9, %6 : vector<16x32xf32>
    %11 = arith.select %8, %6, %10 : vector<16x32xi1>, vector<16x32xf32>
    %12 = vector.shape_cast %11 : vector<16x32xf32> to vector<2x8x32xf32>
    %c0_8 = arith.constant 0 : index
    %c0_9 = arith.constant 0 : index
    %13 = vector.load %arg4[%c0_8, %c0_9] : memref<1x32xf32, #tpu.memory_space<vmem>>, vector<1x32xf32>
    %14 = vector.shape_cast %13 : vector<1x32xf32> to vector<1x1x32xf32>
    %15 = vector.broadcast %14 : vector<1x1x32xf32> to vector<2x8x32xf32>
    %16 = arith.mulf %12, %15 : vector<2x8x32xf32>
    %cst_10 = arith.constant dense<0.000000e+00> : vector<2x8xf32>
    %17 = vector.multi_reduction <add>, %16, %cst_10 [2] : vector<2x8x32xf32> to vector<2x8xf32>
    %c0_11 = arith.constant 0 : index
    %c0_12 = arith.constant 0 : index
    %18 = memref.load %arg5[%c0_11, %c0_12] : memref<1x1xf32, #tpu.memory_space<smem>>
    %19 = vector.broadcast %18 : f32 to vector<2x8xf32>
    %20 = arith.addf %17, %19 : vector<2x8xf32>
    %cst_13 = arith.constant dense<0xFF800000> : vector<2xf32>
    %21 = vector.multi_reduction <maximumf>, %20, %cst_13 [1] : vector<2x8xf32> to vector<2xf32>
    %22 = vector.shape_cast %21 : vector<2xf32> to vector<2x1xf32>
    %23 = vector.broadcast %22 : vector<2x1xf32> to vector<2x8xf32>
    %24 = arith.subf %20, %23 : vector<2x8xf32>
    %25 = math.exp %24 : vector<2x8xf32>
    %cst_14 = arith.constant dense<0.000000e+00> : vector<2xf32>
    %26 = vector.multi_reduction <add>, %25, %cst_14 [1] : vector<2x8xf32> to vector<2xf32>
    %27 = vector.shape_cast %26 : vector<2xf32> to vector<2x1xf32>
    %28 = tpu.reciprocal %27 {approx = true} : vector<2x1xf32> -> vector<2x1xf32>
    %29 = vector.broadcast %28 : vector<2x1xf32> to vector<2x8xf32>
    %30 = arith.mulf %25, %29 : vector<2x8xf32>
    %31 = tpu.concatenate %30, %30 in 1 : vector<2x8xf32>, vector<2x8xf32> -> vector<2x16xf32>
    %32 = tpu.iota {dimensions = array<i32: 1>} : vector<2x16xi32>
    %33 = tpu.iota {dimensions = array<i32: 0>} : vector<2x16xi32>
    %c8_i32 = arith.constant 8 : i32
    %34 = vector.broadcast %c8_i32 : i32 to vector<2x16xi32>
    %35 = arith.muli %33, %34 : vector<2x16xi32>
    %36 = arith.cmpi sge, %32, %35 : vector<2x16xi32>
    %c8_i32_15 = arith.constant 8 : i32
    %37 = vector.broadcast %c8_i32_15 : i32 to vector<2x16xi32>
    %38 = arith.addi %35, %37 : vector<2x16xi32>
    %39 = arith.cmpi slt, %32, %38 : vector<2x16xi32>
    %40 = arith.andi %36, %39 : vector<2x16xi1>
    %cst_16 = arith.constant 0.000000e+00 : f32
    %41 = vector.broadcast %cst_16 : f32 to vector<2x16xf32>
    %42 = arith.select %40, %31, %41 : vector<2x16xi1>, vector<2x16xf32>
    %cst_17 = arith.constant dense<0.000000e+00> : vector<2x32xf32>
    %43 = tpu.matmul %42, %1, %cst_17 {dimension_numbers = #tpu.dot_dimension_numbers<[1], [0], [0], [1], [0, 0, 1, 1], [], []>} : vector<2x16xf32>, vector<16x32xf32>, vector<2x32xf32> -> vector<2x32xf32>
    %c0_18 = arith.constant 0 : index
    %c0_19 = arith.constant 0 : index
    %44 = vector.load %arg6[%c0_18, %c0_19] : memref<32x16xf32, #tpu.memory_space<vmem>>, vector<32x16xf32>
    %cst_20 = arith.constant dense<0.000000e+00> : vector<2x16xf32>
    %45 = tpu.matmul %43, %44, %cst_20 {dimension_numbers = #tpu.dot_dimension_numbers<[1], [0], [0], [1], [0, 0, 1, 1], [], []>} : vector<2x32xf32>, vector<32x16xf32>, vector<2x16xf32> -> vector<2x16xf32>
    %c0_21 = arith.constant 0 : index
    %c0_22 = arith.constant 0 : index
    %46 = vector.load %arg7[%c0_21, %c0_22] : memref<1x16xf32, #tpu.memory_space<vmem>>, vector<1x16xf32>
    %47 = vector.broadcast %46 : vector<1x16xf32> to vector<2x16xf32>
    %48 = arith.addf %45, %47 : vector<2x16xf32>
    %cst_23 = arith.constant 0.000000e+00 : f32
    %49 = vector.broadcast %cst_23 : f32 to vector<2x16xf32>
    %50 = arith.cmpf ogt, %48, %49 : vector<2x16xf32>
    %cst_24 = arith.constant 0.00999999977 : f32
    %51 = vector.broadcast %cst_24 : f32 to vector<2x16xf32>
    %52 = arith.mulf %51, %48 : vector<2x16xf32>
    %53 = arith.select %50, %48, %52 : vector<2x16xi1>, vector<2x16xf32>
    %c0_25 = arith.constant 0 : index
    %c0_26 = arith.constant 0 : index
    %54 = vector.load %arg8[%c0_25, %c0_26] : memref<16x1xf32, #tpu.memory_space<vmem>>, vector<16x1xf32>
    %cst_27 = arith.constant dense<0.000000e+00> : vector<2x1xf32>
    %55 = tpu.matmul %53, %54, %cst_27 {dimension_numbers = #tpu.dot_dimension_numbers<[1], [0], [0], [1], [0, 0, 1, 1], [], []>} : vector<2x16xf32>, vector<16x1xf32>, vector<2x1xf32> -> vector<2x1xf32>
    %c0_28 = arith.constant 0 : index
    %c0_29 = arith.constant 0 : index
    %56 = memref.load %arg9[%c0_28, %c0_29] : memref<1x1xf32, #tpu.memory_space<smem>>
    %57 = vector.broadcast %56 : f32 to vector<2x1xf32>
    %58 = arith.addf %55, %57 : vector<2x1xf32>
    %cst_30 = arith.constant 0.000000e+00 : f32
    %59 = vector.broadcast %cst_30 : f32 to vector<2x1xf32>
    %60 = arith.subf %59, %58 : vector<2x1xf32>
    %61 = math.exp %60 : vector<2x1xf32>
    %cst_31 = arith.constant 1.000000e+00 : f32
    %62 = vector.broadcast %cst_31 : f32 to vector<2x1xf32>
    %63 = arith.addf %62, %61 : vector<2x1xf32>
    %64 = tpu.reciprocal %63 {approx = true} : vector<2x1xf32> -> vector<2x1xf32>
    %cst_32 = arith.constant 9.99999974E-6 : f32
    %cst_33 = arith.constant 0.999989986 : f32
    %65 = vector.broadcast %cst_32 : f32 to vector<2x1xf32>
    %66 = arith.maximumf %65, %64 : vector<2x1xf32>
    %67 = vector.broadcast %cst_33 : f32 to vector<2x1xf32>
    %68 = arith.minimumf %67, %66 : vector<2x1xf32>
    %69 = tpu.iota {dimensions = array<i32: 0>} : vector<2x2xi32>
    %70 = tpu.iota {dimensions = array<i32: 1>} : vector<2x2xi32>
    %71 = arith.cmpi eq, %69, %70 : vector<2x2xi32>
    %cst_34 = arith.constant 0.000000e+00 : f32
    %72 = vector.shape_cast %68 : vector<2x1xf32> to vector<2x1xf32>
    %73 = vector.broadcast %72 : vector<2x1xf32> to vector<2x2xf32>
    %74 = vector.broadcast %cst_34 : f32 to vector<2x2xf32>
    %75 = arith.select %71, %73, %74 : vector<2x2xi1>, vector<2x2xf32>
    %cst_35 = arith.constant dense<0.000000e+00> : vector<2xf32>
    %76 = vector.multi_reduction <add>, %75, %cst_35 [0] : vector<2x2xf32> to vector<2xf32>
    %77 = vector.shape_cast %76 : vector<2xf32> to vector<1x2xf32>
    %78 = vector.shape_cast %77 : vector<1x2xf32> to vector<1x1x2xf32>
    %c0_36 = arith.constant 0 : index
    %c0_37 = arith.constant 0 : index
    %c0_38 = arith.constant 0 : index
    %79 = vector.load %arg10[%c0_36, %c0_37, %c0_38] : memref<1x1x2xf32, #tpu.memory_space<vmem>>, vector<1x1x2xf32>
    tpu.vector_store %arg10[%c0_36, %c0_37, %c0_38], %78 {strides = array<i32>} : memref<1x1x2xf32, #tpu.memory_space<vmem>>, vector<1x1x2xf32>,
    return
  }
  func.func @transform_0(%arg0: i32) -> (i32, i32, i32) {
    %c0_i32 = arith.constant 0 : i32
    %c0_i32_0 = arith.constant 0 : i32
    %c0_i32_1 = arith.constant 0 : i32
    return %arg0, %c0_i32, %c0_i32_0 : i32, i32, i32
  }
  func.func @transform_1(%arg0: i32) -> (i32, i32) {
    %c0_i32 = arith.constant 0 : i32
    %c0_i32_0 = arith.constant 0 : i32
    %c0_i32_1 = arith.constant 0 : i32
    return %c0_i32, %c0_i32_0 : i32, i32
  }
  func.func @transform_2(%arg0: i32) -> (i32, i32) {
    %c0_i32 = arith.constant 0 : i32
    %c0_i32_0 = arith.constant 0 : i32
    %c0_i32_1 = arith.constant 0 : i32
    return %c0_i32, %c0_i32_0 : i32, i32
  }
  func.func @transform_3(%arg0: i32) -> (i32, i32) {
    %c0_i32 = arith.constant 0 : i32
    %c0_i32_0 = arith.constant 0 : i32
    %c0_i32_1 = arith.constant 0 : i32
    return %c0_i32, %c0_i32_0 : i32, i32
  }
  func.func @transform_4(%arg0: i32) -> (i32, i32) {
    %c0_i32 = arith.constant 0 : i32
    %c0_i32_0 = arith.constant 0 : i32
    %c0_i32_1 = arith.constant 0 : i32
    return %c0_i32, %c0_i32_0 : i32, i32
  }
  func.func @transform_5(%arg0: i32) -> (i32, i32) {
    %c0_i32 = arith.constant 0 : i32
    %c0_i32_0 = arith.constant 0 : i32
    %c0_i32_1 = arith.constant 0 : i32
    return %c0_i32, %c0_i32_0 : i32, i32
  }
  func.func @transform_6(%arg0: i32) -> (i32, i32) {
    %c0_i32 = arith.constant 0 : i32
    %c0_i32_0 = arith.constant 0 : i32
    %c0_i32_1 = arith.constant 0 : i32
    return %c0_i32, %c0_i32_0 : i32, i32
  }
  func.func @transform_7(%arg0: i32) -> (i32, i32) {
    %c0_i32 = arith.constant 0 : i32
    %c0_i32_0 = arith.constant 0 : i32
    %c0_i32_1 = arith.constant 0 : i32
    return %c0_i32, %c0_i32_0 : i32, i32
  }
  func.func @transform_8(%arg0: i32) -> (i32, i32) {
    %c0_i32 = arith.constant 0 : i32
    %c0_i32_0 = arith.constant 0 : i32
    %c0_i32_1 = arith.constant 0 : i32
    return %c0_i32, %c0_i32_0 : i32, i32
  }
  func.func @transform_9(%arg0: i32) -> (i32, i32, i32) {
    %c0_i32 = arith.constant 0 : i32
    %c0_i32_0 = arith.constant 0 : i32
    %c0_i32_1 = arith.constant 0 : i32
    return %arg0, %c0_i32, %c0_i32_0 : i32, i32, i32
  }
}

</mosaic_0001>

<llo_original>
// kernel: tpu_custom_call.1
$region0: #{tpu_custom_call.1}
  #allocation0 [shape = 'u32[]', space=smem, size = 0x4, offset = 0x4, fixed_abs, tag = 'smem constant byte address 0x4 - core index']
  #allocation1 [shape = 'u32[144,128]{1,0:T(1,128)}', space=vmem, size = 0x12000, scoped, tag = 'internal scratch']
  #allocation2 [shape = 'f32[1,1]{1,0:T(1,128)S(6)}', space=smem, size = 0x200, scoped, tag = 'scoped memory for tpu_custom_call.1']
  #allocation3 [shape = 'f32[1,1]{1,0:T(1,128)S(6)}', space=smem, size = 0x200, scoped, tag = 'scoped memory for tpu_custom_call.1']
  %s0 = inlined_call_operand.vmem [shape: f32[2,8,32], index: 0, kind: input, shape index: {}]
  %s1 = inlined_call_operand.vmem [shape: f32[32,32], index: 1, kind: input, shape index: {}]
  %s2 = inlined_call_operand.vmem [shape: f32[1,32], index: 2, kind: input, shape index: {}]
  %s3 = inlined_call_operand.vmem [shape: f32[1,32], index: 3, kind: input, shape index: {}]
  %s4 = inlined_call_operand.<no memory space> [shape: f32[1,1], index: 4, kind: input, shape index: {}]
  %s5 = inlined_call_operand.vmem [shape: f32[32,16], index: 5, kind: input, shape index: {}]
  %s6 = inlined_call_operand.vmem [shape: f32[1,16], index: 6, kind: input, shape index: {}]
  %s7 = inlined_call_operand.vmem [shape: f32[16,1], index: 7, kind: input, shape index: {}]
  %s8 = inlined_call_operand.<no memory space> [shape: f32[1,1], index: 8, kind: input, shape index: {}]
  %s9 = inlined_call_operand.hbm [shape: f32[1,1,2], index: 9, kind: output, shape index: {}]
  %s10 = sld [smem:[#allocation0]]
  $region46: #{tpu_custom_call.1} parent=0
    _
  %s12 = ssub.s32 1, %s10
  %s13 = scalar_select 0, %s12, %s10
  %14 = sst [smem:[#allocation2]] %s4
  %15 = sst [smem:[#allocation3]] %s8
  $region1: #{tpu_custom_call.1} parent=0
    #allocation4 [shape = 'u8[512]{0}', space=vmem, size = 0x400, scoped, tag = 'output window, operand 0, single buffered']
    #allocation5 [shape = 's32[1]{0}', space=sflag, size = 0x4, scoped, tag = 'scoped memory for tpu_custom_call.1']
    %16 = vsyncpa [#allocation5], 0
    // Predicated region
    $region2: #{tpu_custom_call.1} parent=1 // pred_check
      _
    $region3: #{tpu_custom_call.1} parent=1 // pred_check_branch
      %18 = sbr.rel (0) target = $region5
    $region4: #{tpu_custom_call.1} parent=1 // pred_region
      _
    $region5: #{tpu_custom_call.1} parent=1 // pred_fallthru
      _
    // Predicated region
    $region6: #{tpu_custom_call.1} parent=1 // pred_check
      _
    $region7: #{tpu_custom_call.1} parent=1 // pred_check_branch
      %20 = sbr.rel (0) target = $region9
    $region8: #{tpu_custom_call.1} parent=1 // pred_region
      _
    $region9: #{tpu_custom_call.1} parent=1 // pred_fallthru
      _
    // Predicated region
    $region10: #{tpu_custom_call.1} parent=1 // pred_check
      _
    $region11: #{tpu_custom_call.1} parent=1 // pred_check_branch
      %22 = sbr.rel (0) target = $region13
    $region12: #{tpu_custom_call.1} parent=1 // pred_region
      _
    $region13: #{tpu_custom_call.1} parent=1 // pred_fallthru
      _
    // Predicated region
    $region14: #{tpu_custom_call.1} parent=1 // pred_check
      _
    $region15: #{tpu_custom_call.1} parent=1 // pred_check_branch
      %24 = sbr.rel (0) target = $region17
    $region16: #{tpu_custom_call.1} parent=1 // pred_region
      _
    $region17: #{tpu_custom_call.1} parent=1 // pred_fallthru
      _
    // Predicated region
    $region18: #{tpu_custom_call.1} parent=1 // pred_check
      _
    $region19: #{tpu_custom_call.1} parent=1 // pred_check_branch
      %26 = sbr.rel (0) target = $region21
    $region20: #{tpu_custom_call.1} parent=1 // pred_region
      _
    $region21: #{tpu_custom_call.1} parent=1 // pred_fallthru
      _
    // Predicated region
    $region22: #{tpu_custom_call.1} parent=1 // pred_check
      _
    $region23: #{tpu_custom_call.1} parent=1 // pred_check_branch
      %28 = sbr.rel (0) target = $region25
    $region24: #{tpu_custom_call.1} parent=1 // pred_region
      _
    $region25: #{tpu_custom_call.1} parent=1 // pred_fallthru
      _
    // Predicated region
    $region26: #{tpu_custom_call.1} parent=1 // pred_check
      _
    $region27: #{tpu_custom_call.1} parent=1 // pred_check_branch
      %30 = sbr.rel (0) target = $region29
    $region28: #{tpu_custom_call.1} parent=1 // pred_region
      _
    $region29: #{tpu_custom_call.1} parent=1 // pred_fallthru
      _
    // Predicated region
    $region30: #{tpu_custom_call.1} parent=1 // pred_check
      _
    $region31: #{tpu_custom_call.1} parent=1 // pred_check_branch
      %32 = sbr.rel (0) target = $region33
    $region32: #{tpu_custom_call.1} parent=1 // pred_region
      _
    $region33: #{tpu_custom_call.1} parent=1 // pred_fallthru
      _
    // Predicated region
    $region34: #{tpu_custom_call.1} parent=1 // pred_check
      _
    $region35: #{tpu_custom_call.1} parent=1 // pred_check_branch
      %34 = sbr.rel (0) target = $region37
    $region36: #{tpu_custom_call.1} parent=1 // pred_region
      _
    $region37: #{tpu_custom_call.1} parent=1 // pred_fallthru
      _
    %v35 = vld [vmem:[%s0] sm:$0xff]
    %v36 = vld [vmem:[%s0 + $0x8] sm:$0xff]
    %v37 = vld [vmem:[%s1] sm:$0xff]
    %v38 = vld [vmem:[%s1 + $0x8] sm:$0xff]
    %v39 = vld [vmem:[%s1 + $0x10] sm:$0xff]
    %v40 = vld [vmem:[%s1 + $0x18] sm:$0xff]
    %v41 = vld [vmem:[%s2] sm:$0x1]
    %v43 = vlaneseq
    %v44 = vshrl.u32 %v43, 7
    %v45 = vsub.s32 0, %v44
    %v46 = vrot.slane %v41, %v45
    %vm48 = vcmask 261120
    %v50 = vsel %vm48, %v35, 0
    %v53 = vsel %vm48, %v36, 0
    %55 = vmatprep.subr.mxu0 0.0
    %56 = vmatpush1.msra.mxu0 0.0
    %57 = vmatprep.subr.mxu0 0.0
    %58 = vmatpush1.msra.mxu0 0.0
    %59 = vmatprep.subr.mxu0 0.0
    %60 = vmatpush1.msra.mxu0 0.0
    %61 = vmatprep.subr.mxu0 0.0
    %62 = vmatpush1.msra.mxu0 0.0
    %63 = vmatprep.subr.mxu0 0.0
    %64 = vmatpush1.msra.mxu0 0.0
    %65 = vmatprep.subr.mxu0 0.0
    %66 = vmatpush1.msra.mxu0 0.0
    %67 = vmatprep.subr.mxu0 0.0
    %68 = vmatpush1.msra.mxu0 0.0
    %69 = vmatprep.subr.mxu0 0.0
    %70 = vmatpush1.msra.mxu0 0.0
    %71 = vmatprep.subr.mxu0 0.0
    %72 = vmatpush1.msra.mxu0 0.0
    %73 = vmatprep.subr.mxu0 0.0
    %74 = vmatpush1.msra.mxu0 0.0
    %75 = vmatprep.subr.mxu0 0.0
    %76 = vmatpush1.msra.mxu0 0.0
    %77 = vmatprep.subr.mxu0 0.0
    %78 = vmatpush1.msra.mxu0 0.0
    %79 = vmatprep.subr.mxu0 0.0
    %80 = vmatpush1.msra.mxu0 %v40
    %81 = vmatprep.subr.mxu0 0.0
    %82 = vmatpush1.msra.mxu0 %v39
    %83 = vmatprep.subr.mxu0 0.0
    %84 = vmatpush1.msra.mxu0 %v38
    %85 = vmatprep.subr.mxu0 0.0
    %86 = vmatpush1.msra.mxu0 %v37
    %87 = vmatprep.subr.mxu0 0.0
    %88 = vmatpush2.msra.mxu0 0.0
    %89 = vmatprep.subr.mxu0 0.0
    %90 = vmatpush2.msra.mxu0 0.0
    %91 = vmatprep.subr.mxu0 0.0
    %92 = vmatpush2.msra.mxu0 0.0
    %93 = vmatprep.subr.mxu0 0.0
    %94 = vmatpush2.msra.mxu0 0.0
    %95 = vmatprep.subr.mxu0 0.0
    %96 = vmatpush2.msra.mxu0 0.0
    %97 = vmatprep.subr.mxu0 0.0
    %98 = vmatpush2.msra.mxu0 0.0
    %99 = vmatprep.subr.mxu0 0.0
    %100 = vmatpush2.msra.mxu0 0.0
    %101 = vmatprep.subr.mxu0 0.0
    %102 = vmatpush2.msra.mxu0 0.0
    %103 = vmatprep.subr.mxu0 0.0
    %104 = vmatpush2.msra.mxu0 0.0
    %105 = vmatprep.subr.mxu0 0.0
    %106 = vmatpush2.msra.mxu0 0.0
    %107 = vmatprep.subr.mxu0 0.0
    %108 = vmatpush2.msra.mxu0 0.0
    %109 = vmatprep.subr.mxu0 0.0
    %110 = vmatpush2.msra.mxu0 0.0
    %111 = vmatprep.subr.mxu0 0.0
    %112 = vmatpush2.msra.mxu0 0.0
    %113 = vmatprep.subr.mxu0 0.0
    %114 = vmatpush2.msra.mxu0 0.0
    %115 = vmatprep.subr.mxu0 0.0
    %116 = vmatpush2.msra.mxu0 0.0
    %117 = vmatprep.subr.mxu0 0.0
    %118 = vmatpush2.msra.mxu0 0.0
    %119 = vmatprep.mubr.f32.mxu0 0.0
    %120 = vmatmul.mubr.f32.gmra.mxu0 %v50
    %v121 = vpop.f32.mrf.mxu0
    %v122 = vadd.f32 %v46, %v121
    %v123 = vpop.f32.mrf.mxu0
    %124 = vmatprep.mubr.f32.mxu0 0.0
    %125 = vmatmul.mubr.f32.gmra.mxu0 %v53
    %v126 = vpop.f32.mrf.mxu0
    %v127 = vadd.f32 %v46, %v126
    %v128 = vpop.f32.mrf.mxu0
    %129 = vdwg.mxu0
    %vm130 = vcmp.gt.f32.partialorder %v122, 0.0
    %vm131 = vcmp.gt.f32.partialorder %v127, 0.0
    %v132 = vmul.f32 %v122, 0.01
    %v133 = vmul.f32 %v127, 0.01
    %v134 = vsel %vm130, %v122, %v132
    %v135 = vsel %vm131, %v127, %v133
    %v136 = vld [vmem:[%s3] sm:$0x1]
    %v138 = vlaneseq
    %v139 = vshrl.u32 %v138, 7
    %v140 = vsub.s32 0, %v139
    %v141 = vrot.slane %v136, %v140
    %v143 = vmul.f32 %v134, %v141
    %v144 = vmul.f32 %v135, %v141
    %v145 = vsel %vm48, %v143, 0.0
    %146 = vadd.xlane.f32.xlu0 %v145
    %v147 = vpop.xlane.xlu0 %146
    %v148 = vsel %vm48, %v144, 0.0
    %149 = vadd.xlane.f32.xlu0 %v148
    %v150 = vpop.xlane.xlu0 %149
    %s151 = sld [smem:[#allocation2]]
    %v152 = vstv %s151
    %v153 = vadd.f32 %v147, %v152
    %v154 = vadd.f32 %v150, %v152
    %v157 = vlaneseq
    %v158 = vand.u32 %v157, 127
    %v159 = vlaneseq
    %v160 = vshrl.u32 %v159, 7
    %v161 = vsub.s32 %v158, %v160
    %v162 = vrot.slane %v153, %v161
    %v163 = vlaneseq
    %v164 = vshrl.u32 %v163, 7
    %v165 = vsub.s32 %v158, %v164
    %v166 = vrot.slane %v154, %v165
    %vm167 = vcmask 1041409
    %v168 = vsel %vm167, %v166, %v162
    %vm170 = vcmask 58368
    %v171 = vsel %vm170, %v168, -inf
    %172 = vmax.xlane.f32.xlu0 %v171
    %v173 = vpop.xlane.xlu0 %172
    %v175 = vlaneseq
    %v176 = vshrl.u32 %v175, 7
    %v177 = vsub.s32 0, %v176
    %v178 = vrot.slane %v173, %v177
    %v179 = vlaneseq
    %v180 = vshrl.u32 %v179, 7
    %v181 = vsub.s32 1, %v180
    %v182 = vrot.slane %v173, %v181
    %v185 = vsub.f32 %v153, %v178
    %v186 = vsub.f32 %v154, %v182
    %v187 = vmul.f32 %v185, 1.442695
    %v188 = vpow.pop %v187
    %v189 = vmul.f32 %v186, 1.442695
    %v190 = vpow.pop %v189
    %193 = vset.pattern.permute.xlu0 0
    %194 = vperm.xlu0 %193, %v188
    %v195 = vpop.permute.xlu0 %194
    %196 = vset.pattern.permute.xlu0 0
    %197 = vperm.xlu0 %196, %v190
    %v198 = vpop.permute.xlu0 %197
    %v199 = vlaneseq
    %v200 = vshrl.u32 %v199, 7
    %v201 = vsub.s32 %v158, %v200
    %v202 = vrot.slane %v195, %v201
    %v203 = vlaneseq
    %v204 = vshrl.u32 %v203, 7
    %v205 = vsub.s32 %v158, %v204
    %v206 = vrot.slane %v198, %v205
    %v207 = vsel %vm167, %v206, %v202
    %v209 = vsel %vm170, %v207, 0.0
    %210 = vadd.xlane.f32.xlu0 %v209
    %v211 = vpop.xlane.xlu0 %210
    %v212 = vrcp.pop %v211
    %v214 = vlaneseq
    %v215 = vshrl.u32 %v214, 7
    %v216 = vsub.s32 0, %v215
    %v217 = vrot.slane %v212, %v216
    %v218 = vlaneseq
    %v219 = vshrl.u32 %v218, 7
    %v220 = vsub.s32 1, %v219
    %v221 = vrot.slane %v212, %v220
    %v224 = vmul.f32 %v188, %v217
    %v225 = vmul.f32 %v190, %v221
    %228 = vset.pattern.permute.xlu0 0
    %229 = vperm.xlu0 %228, %v224
    %v230 = vpop.permute.xlu0 %229
    %231 = vset.pattern.permute.xlu0 0
    %232 = vperm.xlu0 %231, %v225
    %v233 = vpop.permute.xlu0 %232
    %v234 = vlaneseq
    %v235 = vshrl.u32 %v234, 7
    %v236 = vsub.s32 %v158, %v235
    %v237 = vrot.slane %v230, %v236
    %v238 = vlaneseq
    %v239 = vshrl.u32 %v238, 7
    %v240 = vsub.s32 %v158, %v239
    %v241 = vrot.slane %v233, %v240
    %v242 = vsel %vm167, %v241, %v237
    %v244 = vadd.s32 %v158, 4294967288
    %v245 = vlaneseq
    %v246 = vshrl.u32 %v245, 7
    %v247 = vsub.s32 %v244, %v246
    %v248 = vrot.slane %v230, %v247
    %v249 = vlaneseq
    %v250 = vshrl.u32 %v249, 7
    %v251 = vsub.s32 %v244, %v250
    %v252 = vrot.slane %v233, %v251
    %v253 = vsel %vm167, %v252, %v248
    %vm255 = vcmask 64512
    %v256 = vsel %vm255, %v242, %v253
    %v257 = vlaneseq
    %v258 = vshrl.u32 %v257, 7
    %v259 = vmul.u32 %v258, 8
    %vm260 = vcmp.ge.s32.totalorder %v158, %v259
    %v261 = vadd.s32 %v259, 8
    %vm262 = vcmp.lt.s32.totalorder %v158, %v261
    %vm263 = vmand %vm260, %vm262
    %v264 = vsel %vm263, %v256, 0.0
    %vm265 = vcmask 130048
    %v267 = vsel %vm265, %v264, 0
    %269 = vmatprep.subr.mxu0 0.0
    %270 = vmatpush1.msra.mxu0 0.0
    %271 = vmatprep.subr.mxu0 0.0
    %272 = vmatpush1.msra.mxu0 0.0
    %273 = vmatprep.subr.mxu0 0.0
    %274 = vmatpush1.msra.mxu0 0.0
    %275 = vmatprep.subr.mxu0 0.0
    %276 = vmatpush1.msra.mxu0 0.0
    %277 = vmatprep.subr.mxu0 0.0
    %278 = vmatpush1.msra.mxu0 0.0
    %279 = vmatprep.subr.mxu0 0.0
    %280 = vmatpush1.msra.mxu0 0.0
    %281 = vmatprep.subr.mxu0 0.0
    %282 = vmatpush1.msra.mxu0 0.0
    %283 = vmatprep.subr.mxu0 0.0
    %284 = vmatpush1.msra.mxu0 0.0
    %285 = vmatprep.subr.mxu0 0.0
    %286 = vmatpush1.msra.mxu0 0.0
    %287 = vmatprep.subr.mxu0 0.0
    %288 = vmatpush1.msra.mxu0 0.0
    %289 = vmatprep.subr.mxu0 0.0
    %290 = vmatpush1.msra.mxu0 0.0
    %291 = vmatprep.subr.mxu0 0.0
    %292 = vmatpush1.msra.mxu0 0.0
    %293 = vmatprep.subr.mxu0 0.0
    %294 = vmatpush1.msra.mxu0 0.0
    %295 = vmatprep.subr.mxu0 0.0
    %296 = vmatpush1.msra.mxu0 0.0
    %297 = vmatprep.subr.mxu0 0.0
    %298 = vmatpush1.msra.mxu0 %v36
    %299 = vmatprep.subr.mxu0 0.0
    %300 = vmatpush1.msra.mxu0 %v35
    %301 = vmatprep.subr.mxu0 0.0
    %302 = vmatpush2.msra.mxu0 0.0
    %303 = vmatprep.subr.mxu0 0.0
    %304 = vmatpush2.msra.mxu0 0.0
    %305 = vmatprep.subr.mxu0 0.0
    %306 = vmatpush2.msra.mxu0 0.0
    %307 = vmatprep.subr.mxu0 0.0
    %308 = vmatpush2.msra.mxu0 0.0
    %309 = vmatprep.subr.mxu0 0.0
    %310 = vmatpush2.msra.mxu0 0.0
    %311 = vmatprep.subr.mxu0 0.0
    %312 = vmatpush2.msra.mxu0 0.0
    %313 = vmatprep.subr.mxu0 0.0
    %314 = vmatpush2.msra.mxu0 0.0
    %315 = vmatprep.subr.mxu0 0.0
    %316 = vmatpush2.msra.mxu0 0.0
    %317 = vmatprep.subr.mxu0 0.0
    %318 = vmatpush2.msra.mxu0 0.0
    %319 = vmatprep.subr.mxu0 0.0
    %320 = vmatpush2.msra.mxu0 0.0
    %321 = vmatprep.subr.mxu0 0.0
    %322 = vmatpush2.msra.mxu0 0.0
    %323 = vmatprep.subr.mxu0 0.0
    %324 = vmatpush2.msra.mxu0 0.0
    %325 = vmatprep.subr.mxu0 0.0
    %326 = vmatpush2.msra.mxu0 0.0
    %327 = vmatprep.subr.mxu0 0.0
    %328 = vmatpush2.msra.mxu0 0.0
    %329 = vmatprep.subr.mxu0 0.0
    %330 = vmatpush2.msra.mxu0 0.0
    %331 = vmatprep.subr.mxu0 0.0
    %332 = vmatpush2.msra.mxu0 0.0
    %333 = vmatprep.mubr.f32.mxu0 0.0
    %334 = vmatmul.mubr.f32.gmra.mxu0 %v267
    %v335 = vpop.f32.mrf.mxu0
    %v336 = vadd.f32 0.0, %v335
    %v337 = vpop.f32.mrf.mxu0
    %338 = vdwg.mxu0
    %v339 = vld [vmem:[%s5] sm:$0xff]
    %v340 = vld [vmem:[%s5 + $0x8] sm:$0xff]
    %v341 = vld [vmem:[%s5 + $0x10] sm:$0xff]
    %v342 = vld [vmem:[%s5 + $0x18] sm:$0xff]
    %v343 = vld [vmem:[%s6] sm:$0x1]
    %v345 = vlaneseq
    %v346 = vshrl.u32 %v345, 7
    %v347 = vsub.s32 0, %v346
    %v348 = vrot.slane %v343, %v347
    %v351 = vsel %vm48, %v336, 0
    %353 = vmatprep.subr.mxu0 0.0
    %354 = vmatpush1.msra.mxu0 0.0
    %355 = vmatprep.subr.mxu0 0.0
    %356 = vmatpush1.msra.mxu0 0.0
    %357 = vmatprep.subr.mxu0 0.0
    %358 = vmatpush1.msra.mxu0 0.0
    %359 = vmatprep.subr.mxu0 0.0
    %360 = vmatpush1.msra.mxu0 0.0
    %361 = vmatprep.subr.mxu0 0.0
    %362 = vmatpush1.msra.mxu0 0.0
    %363 = vmatprep.subr.mxu0 0.0
    %364 = vmatpush1.msra.mxu0 0.0
    %365 = vmatprep.subr.mxu0 0.0
    %366 = vmatpush1.msra.mxu0 0.0
    %367 = vmatprep.subr.mxu0 0.0
    %368 = vmatpush1.msra.mxu0 0.0
    %369 = vmatprep.subr.mxu0 0.0
    %370 = vmatpush1.msra.mxu0 0.0
    %371 = vmatprep.subr.mxu0 0.0
    %372 = vmatpush1.msra.mxu0 0.0
    %373 = vmatprep.subr.mxu0 0.0
    %374 = vmatpush1.msra.mxu0 0.0
    %375 = vmatprep.subr.mxu0 0.0
    %376 = vmatpush1.msra.mxu0 0.0
    %377 = vmatprep.subr.mxu0 0.0
    %378 = vmatpush1.msra.mxu0 %v342
    %379 = vmatprep.subr.mxu0 0.0
    %380 = vmatpush1.msra.mxu0 %v341
    %381 = vmatprep.subr.mxu0 0.0
    %382 = vmatpush1.msra.mxu0 %v340
    %383 = vmatprep.subr.mxu0 0.0
    %384 = vmatpush1.msra.mxu0 %v339
    %385 = vmatprep.subr.mxu0 0.0
    %386 = vmatpush2.msra.mxu0 0.0
    %387 = vmatprep.subr.mxu0 0.0
    %388 = vmatpush2.msra.mxu0 0.0
    %389 = vmatprep.subr.mxu0 0.0
    %390 = vmatpush2.msra.mxu0 0.0
    %391 = vmatprep.subr.mxu0 0.0
    %392 = vmatpush2.msra.mxu0 0.0
    %393 = vmatprep.subr.mxu0 0.0
    %394 = vmatpush2.msra.mxu0 0.0
    %395 = vmatprep.subr.mxu0 0.0
    %396 = vmatpush2.msra.mxu0 0.0
    %397 = vmatprep.subr.mxu0 0.0
    %398 = vmatpush2.msra.mxu0 0.0
    %399 = vmatprep.subr.mxu0 0.0
    %400 = vmatpush2.msra.mxu0 0.0
    %401 = vmatprep.subr.mxu0 0.0
    %402 = vmatpush2.msra.mxu0 0.0
    %403 = vmatprep.subr.mxu0 0.0
    %404 = vmatpush2.msra.mxu0 0.0
    %405 = vmatprep.subr.mxu0 0.0
    %406 = vmatpush2.msra.mxu0 0.0
    %407 = vmatprep.subr.mxu0 0.0
    %408 = vmatpush2.msra.mxu0 0.0
    %409 = vmatprep.subr.mxu0 0.0
    %410 = vmatpush2.msra.mxu0 0.0
    %411 = vmatprep.subr.mxu0 0.0
    %412 = vmatpush2.msra.mxu0 0.0
    %413 = vmatprep.subr.mxu0 0.0
    %414 = vmatpush2.msra.mxu0 0.0
    %415 = vmatprep.subr.mxu0 0.0
    %416 = vmatpush2.msra.mxu0 0.0
    %417 = vmatprep.mubr.f32.mxu0 0.0
    %418 = vmatmul.mubr.f32.gmra.mxu0 %v351
    %v419 = vpop.f32.mrf.mxu0
    %v420 = vadd.f32 %v348, %v419
    %v421 = vpop.f32.mrf.mxu0
    %422 = vdwg.mxu0
    %vm423 = vcmp.gt.f32.partialorder %v420, 0.0
    %v424 = vmul.f32 %v420, 0.01
    %v425 = vsel %vm423, %v420, %v424
    %v426 = vld [vmem:[%s7] sm:$0xff]
    %v427 = vld [vmem:[%s7 + $0x8] sm:$0xff]
    %s428 = sld [smem:[#allocation3]]
    %v429 = vstv %s428
    %v431 = vsel %vm265, %v425, 0
    %433 = vmatprep.subr.mxu0 0.0
    %434 = vmatpush1.msra.mxu0 0.0
    %435 = vmatprep.subr.mxu0 0.0
    %436 = vmatpush1.msra.mxu0 0.0
    %437 = vmatprep.subr.mxu0 0.0
    %438 = vmatpush1.msra.mxu0 0.0
    %439 = vmatprep.subr.mxu0 0.0
    %440 = vmatpush1.msra.mxu0 0.0
    %441 = vmatprep.subr.mxu0 0.0
    %442 = vmatpush1.msra.mxu0 0.0
    %443 = vmatprep.subr.mxu0 0.0
    %444 = vmatpush1.msra.mxu0 0.0
    %445 = vmatprep.subr.mxu0 0.0
    %446 = vmatpush1.msra.mxu0 0.0
    %447 = vmatprep.subr.mxu0 0.0
    %448 = vmatpush1.msra.mxu0 0.0
    %449 = vmatprep.subr.mxu0 0.0
    %450 = vmatpush1.msra.mxu0 0.0
    %451 = vmatprep.subr.mxu0 0.0
    %452 = vmatpush1.msra.mxu0 0.0
    %453 = vmatprep.subr.mxu0 0.0
    %454 = vmatpush1.msra.mxu0 0.0
    %455 = vmatprep.subr.mxu0 0.0
    %456 = vmatpush1.msra.mxu0 0.0
    %457 = vmatprep.subr.mxu0 0.0
    %458 = vmatpush1.msra.mxu0 0.0
    %459 = vmatprep.subr.mxu0 0.0
    %460 = vmatpush1.msra.mxu0 0.0
    %461 = vmatprep.subr.mxu0 0.0
    %462 = vmatpush1.msra.mxu0 %v427
    %463 = vmatprep.subr.mxu0 0.0
    %464 = vmatpush1.msra.mxu0 %v426
    %465 = vmatprep.subr.mxu0 0.0
    %466 = vmatpush2.msra.mxu0 0.0
    %467 = vmatprep.subr.mxu0 0.0
    %468 = vmatpush2.msra.mxu0 0.0
    %469 = vmatprep.subr.mxu0 0.0
    %470 = vmatpush2.msra.mxu0 0.0
    %471 = vmatprep.subr.mxu0 0.0
    %472 = vmatpush2.msra.mxu0 0.0
    %473 = vmatprep.subr.mxu0 0.0
    %474 = vmatpush2.msra.mxu0 0.0
    %475 = vmatprep.subr.mxu0 0.0
    %476 = vmatpush2.msra.mxu0 0.0
    %477 = vmatprep.subr.mxu0 0.0
    %478 = vmatpush2.msra.mxu0 0.0
    %479 = vmatprep.subr.mxu0 0.0
    %480 = vmatpush2.msra.mxu0 0.0
    %481 = vmatprep.subr.mxu0 0.0
    %482 = vmatpush2.msra.mxu0 0.0
    %483 = vmatprep.subr.mxu0 0.0
    %484 = vmatpush2.msra.mxu0 0.0
    %485 = vmatprep.subr.mxu0 0.0
    %486 = vmatpush2.msra.mxu0 0.0
    %487 = vmatprep.subr.mxu0 0.0
    %488 = vmatpush2.msra.mxu0 0.0
    %489 = vmatprep.subr.mxu0 0.0
    %490 = vmatpush2.msra.mxu0 0.0
    %491 = vmatprep.subr.mxu0 0.0
    %492 = vmatpush2.msra.mxu0 0.0
    %493 = vmatprep.subr.mxu0 0.0
    %494 = vmatpush2.msra.mxu0 0.0
    %495 = vmatprep.subr.mxu0 0.0
    %496 = vmatpush2.msra.mxu0 0.0
    %497 = vmatprep.mubr.f32.mxu0 0.0
    %498 = vmatmul.mubr.f32.gmra.mxu0 %v431
    %v499 = vpop.f32.mrf.mxu0
    %v500 = vadd.f32 %v429, %v499
    %v501 = vpop.f32.mrf.mxu0
    %502 = vdwg.mxu0
    %v503 = vsub.f32 0.0, %v500
    %v504 = vmul.f32 %v503, 1.442695
    %v505 = vpow.pop %v504
    %v506 = vadd.f32 %v505, 1.0
    %v507 = vrcp.pop %v506
    %v508 = vmax.f32 %v507, 1e-05
    %v509 = vmin.f32 %v508, 0.99999
    %vm510 = vcmp.eq.s32.totalorder %v258, %v158
    %512 = vset.pattern.permute.xlu0 0
    %513 = vperm.xlu0 %512, %v509
    %v514 = vpop.permute.xlu0 %513
    %v516 = vsel %vm510, %v514, 0.0
    %vm517 = vcmask 9216
    %v518 = vsel %vm517, %v516, 0.0
    %v519 = vrot.slane %v518, 4
    %v520 = vadd.f32 %v518, %v519
    %v521 = vrot.slane %v520, 2
    %v522 = vadd.f32 %v520, %v521
    %v523 = vrot.slane %v522, 1
    %v524 = vadd.f32 %v522, %v523
    %vm525 = vcmask 8192
    %526 = vst.msk [vmem:[#allocation4] sm:$0x1] %vm525, %v524
    // Predicated region
    $region38: #{tpu_custom_call.1} parent=1 // pred_check
      _
    $region39: #{tpu_custom_call.1} parent=1 // pred_check_branch
      %528 = sbr.rel (0) target = $region41
    $region40: #{tpu_custom_call.1} parent=1 // pred_region
      %s530 = ssub.s32 16, 16
      %531 = vsyncadd [#allocation5], %s530
      %s533 = sshll.u32 [#allocation4], 4
      %s534 = int_to_ptr.vmem [resolvable:$true] %s533
      %536 = dma.vmem_to_hbm [thread:$0]  %s534, 16, %s9, [#allocation5]
    $region41: #{tpu_custom_call.1} parent=1 // pred_fallthru
      _
    // Predicated region
    $region42: #{tpu_custom_call.1} parent=1 // pred_check
      _
    $region43: #{tpu_custom_call.1} parent=1 // pred_check_branch
      %538 = sbr.rel (0) target = $region45
    $region44: #{tpu_custom_call.1} parent=1 // pred_region
      %539 = dma.done [#allocation5], 16
    $region45: #{tpu_custom_call.1} parent=1 // pred_fallthru
      _
    %540 = vsyncpa [#allocation5], 1

</llo_original>
